<compile_context>
chip_gen: v7x
topology: tpu7x:2x2x1
jax: 0.10.0
libtpu: 0.0.40
codegen_flags: <defaults>
</compile_context>

<pallas_src>
import jax
import jax.numpy as jnp
from jax.experimental import pallas as pl
from jax.experimental.pallas import tpu as pltpu


def lstm_chunk_kernel(gx_ref, whh_ref, h0_ref, c0_ref,
                      hs_ref, hn_ref, cn_ref,
                      h_scr, c_scr):
    """One grid step = one chunk of timesteps of the LSTM recurrence.

    gx_ref:  (TC, B, 4H)  precomputed x@W_ih^T + (b_ih+b_hh), lane-packed
    whh_ref: (H, 4H)      combined recurrent weights (W_hh^T)
    h0_ref:  (B, H)       initial hidden state
    c0_ref:  (B, H)       initial cell state
    hs_ref:  (TC, B, H)   hidden states for this chunk (output)
    hn_ref, cn_ref: (B, H) final states (written on last chunk only)
    h_scr, c_scr: (B, H)  f32 VMEM carry across chunks
    """
    TC, B, G4 = gx_ref.shape
    H = G4 // 4
    chunk = pl.program_id(0)

    @pl.when(chunk == 0)
    def _():
        h_scr[...] = h0_ref[...].astype(jnp.float32)
        c_scr[...] = c0_ref[...].astype(jnp.float32)

    whh = whh_ref[...]  # load once per chunk (constant RHS of every step)

    def step(t, carry):
        h, c = carry
        # One combined recurrent matmul: (B,H)@(H,4H) -> lane-dense (B,4H).
        gates = gx_ref[t] + jnp.dot(h, whh,
                                    preferred_element_type=jnp.float32)
        sig = jax.nn.sigmoid(gates)   # full-vreg EUP pass
        tnh = jnp.tanh(gates)         # full-vreg EUP pass
        i_g = sig[:, 0 * H:1 * H]
        f_g = sig[:, 1 * H:2 * H]
        g_g = tnh[:, 2 * H:3 * H]
        o_g = sig[:, 3 * H:4 * H]
        c_new = f_g * c + i_g * g_g
        h_new = o_g * jnp.tanh(c_new)
        hs_ref[t] = h_new.astype(hs_ref.dtype)
        return (h_new, c_new)

    # Bounded unroll: full LLO visibility for small chunks without blowing
    # instruction memory / vreg live ranges at realistic sequence lengths.
    h_f, c_f = jax.lax.fori_loop(0, TC, step,
                                 (h_scr[...], c_scr[...]),
                                 unroll=min(TC, 8))

    h_scr[...] = h_f
    c_scr[...] = c_f

    @pl.when(chunk == pl.num_programs(0) - 1)
    def _():
        hn_ref[...] = h_f.astype(hn_ref.dtype)
        cn_ref[...] = c_f.astype(cn_ref.dtype)


@jax.jit
def decoder_forward(tokens, emb_table, w_ih, w_hh, b_ih, b_hh,
                    w_out, b_out, h0, c0):
    """Decoder.forward for the l=None path.

    tokens: (B, T) int32
    emb_table: (V, E)  (row 0 is the padding_idx row, already zero)
    w_ih: (4H, E), w_hh: (4H, H), b_ih/b_hh: (4H,)   (PyTorch LSTM layout)
    w_out: (V, H), b_out: (V,)                        (PyTorch Linear layout)
    h0, c0: (B, H)

    Returns (logits (B, T, V), (h_n (1,B,H), c_n (1,B,H))).
    """
    B, T = tokens.shape
    H = w_hh.shape[1]

    # ---- glue (XLA): embedding gather + hoisted input projection ------------
    # TODO(synk): pack_padded_sequence path (l is not None) not implemented;
    # this covers the l=None forward path only.  B is assumed 8-aligned (pad
    # the batch with zeros otherwise).
    x = emb_table[tokens]                                   # (B, T, E)
    bias = (b_ih + b_hh).reshape(1, 1, 4 * H)
    # One big matmul over all timesteps, emitted directly in the kernel's
    # time-major, lane-packed (T, B, 4H) layout (no extra transpose pass).
    gx = jnp.einsum('bte,fe->tbf', x, w_ih) + bias          # (T, B, 4H)
    whh_c = w_hh.T                                          # (H, 4H) combined

    # ---- T-chunked grid for the serial recurrence ---------------------------
    tchunk = T
    if T > 128:
        for cand in range(128, 0, -1):                      # largest divisor <= 128
            if T % cand == 0:
                tchunk = cand
                break
    n_chunks = T // tchunk

    grid_spec = pltpu.PrefetchScalarGridSpec(
        num_scalar_prefetch=0,
        grid=(n_chunks,),
        in_specs=[
            pl.BlockSpec((tchunk, B, 4 * H), lambda i: (i, 0, 0)),  # gx chunk
            pl.BlockSpec((H, 4 * H),         lambda i: (0, 0)),     # W_hh^T
            pl.BlockSpec((B, H),             lambda i: (0, 0)),     # h0
            pl.BlockSpec((B, H),             lambda i: (0, 0)),     # c0
        ],
        out_specs=[
            pl.BlockSpec((tchunk, B, H), lambda i: (i, 0, 0)),      # hidden states
            pl.BlockSpec((B, H),         lambda i: (0, 0)),         # h_n
            pl.BlockSpec((B, H),         lambda i: (0, 0)),         # c_n
        ],
        scratch_shapes=[pltpu.VMEM((B, H), jnp.float32),            # h carry
                        pltpu.VMEM((B, H), jnp.float32)],           # c carry
    )

    hs, h_n, c_n = pl.pallas_call(
        lstm_chunk_kernel,
        out_shape=(jax.ShapeDtypeStruct((T, B, H), jnp.float32),
                   jax.ShapeDtypeStruct((B, H), jnp.float32),
                   jax.ShapeDtypeStruct((B, H), jnp.float32)),
        grid_spec=grid_spec,
        compiler_params=pltpu.CompilerParams(
            dimension_semantics=("arbitrary",),        # serial recurrence axis
            vmem_limit_bytes=32 * 1024 * 1024),
    )(gx, whh_c, h0, c0)

    # ---- hoisted output Linear (MXU-friendly, outside the serial kernel) ----
    logits = jnp.einsum('tbh,vh->btv', hs, w_out) + b_out   # (B, T, V)
    return logits, (h_n[None, :, :], c_n[None, :, :])       # num_layers = 1


def reference_forward(tokens, emb_table, w_ih, w_hh, b_ih, b_hh,
                      w_out, b_out, h0, c0):
    """Pure-JAX reference (PyTorch LSTM + Linear equations)."""
    H = w_hh.shape[1]
    x = emb_table[tokens]                  # (B, T, E)
    xs = jnp.transpose(x, (1, 0, 2))       # (T, B, E)
    bias = b_ih + b_hh

    def step(carry, x_t):
        h, c = carry
        gates = x_t @ w_ih.T + h @ w_hh.T + bias
        i = jax.nn.sigmoid(gates[:, 0 * H:1 * H])
        f = jax.nn.sigmoid(gates[:, 1 * H:2 * H])
        g = jnp.tanh(gates[:, 2 * H:3 * H])
        o = jax.nn.sigmoid(gates[:, 3 * H:4 * H])
        c = f * c + i * g
        h = o * jnp.tanh(c)
        return (h, c), h

    (h_n, c_n), hs = jax.lax.scan(step, (h0, c0), xs)      # hs: (T, B, H)
    logits = jnp.einsum('tbh,vh->btv', hs, w_out) + b_out  # (B, T, V)
    return logits, (h_n[None], c_n[None])


if __name__ == "__main__":
    # Small shapes consistent with the module.  B padded to 8 (sublane count)
    # so the (B, H) state tiles and writebacks are sublane-dense; 4H = 128 so
    # the combined-gate vector is exactly one f32 vreg lane-wise.
    VOCAB = 16          # num_embeddings (embedding rows AND output classes)
    E = 32              # embedding_dim
    H = 32              # hidden_size
    B = 8               # batch
    T = 8               # sequence length

    key = jax.random.PRNGKey(0)
    (k_emb, k_wih, k_whh, k_bih, k_bhh,
     k_wout, k_bout, k_tok) = jax.random.split(key, 8)

    emb_table = jax.random.normal(k_emb, (VOCAB, E), jnp.float32)
    emb_table = emb_table.at[0].set(0.0)   # padding_idx=0 -> zero row

    scale = 1.0 / jnp.sqrt(H)
    w_ih = jax.random.uniform(k_wih, (4 * H, E), jnp.float32, -scale, scale)
    w_hh = jax.random.uniform(k_whh, (4 * H, H), jnp.float32, -scale, scale)
    b_ih = jax.random.uniform(k_bih, (4 * H,), jnp.float32, -scale, scale)
    b_hh = jax.random.uniform(k_bhh, (4 * H,), jnp.float32, -scale, scale)
    w_out = jax.random.uniform(k_wout, (VOCAB, H), jnp.float32, -scale, scale)
    b_out = jax.random.uniform(k_bout, (VOCAB,), jnp.float32, -scale, scale)

    tokens = jax.random.randint(k_tok, (B, T), 0, VOCAB, jnp.int32)
    h0 = jnp.zeros((B, H), jnp.float32)    # default h0=None -> zeros
    c0 = jnp.zeros((B, H), jnp.float32)

    logits, (h_n, c_n) = decoder_forward(
        tokens, emb_table, w_ih, w_hh, b_ih, b_hh, w_out, b_out, h0, c0)
    jax.block_until_ready((logits, h_n, c_n))

    logits_ref, (h_ref, c_ref) = reference_forward(
        tokens, emb_table, w_ih, w_hh, b_ih, b_hh, w_out, b_out, h0, c0)

    assert logits.shape == (B, T, VOCAB)
    assert h_n.shape == (1, B, H) and c_n.shape == (1, B, H)
    # Slightly looser tolerance than 1e-5: in-kernel EUP sigmoid/tanh lowering
    # can differ marginally from the XLA reference transcendentals.
    assert jnp.allclose(logits, logits_ref, atol=1e-4), "logits mismatch vs reference"
    assert jnp.allclose(h_n, h_ref, atol=1e-4), "h_n mismatch vs reference"
    assert jnp.allclose(c_n, c_ref, atol=1e-4), "c_n mismatch vs reference"

    print("KERNEL_OK")
</pallas_src>

<mosaic_0001>
module attributes {stable_mosaic.version = 11 : i64} {
  func.func @lstm_chunk_kernel(%arg0: i32, %arg1: memref<8x8x128xf32, #tpu.memory_space<vmem>>, %arg2: memref<32x128xf32, #tpu.memory_space<vmem>>, %arg3: memref<8x32xf32, #tpu.memory_space<vmem>>, %arg4: memref<8x32xf32, #tpu.memory_space<vmem>>, %arg5: memref<8x8x32xf32, #tpu.memory_space<vmem>>, %arg6: memref<8x32xf32, #tpu.memory_space<vmem>>, %arg7: memref<8x32xf32, #tpu.memory_space<vmem>>, %arg8: memref<8x32xf32, #tpu.memory_space<vmem>>, %arg9: memref<8x32xf32, #tpu.memory_space<vmem>>) attributes {dimension_semantics = [#tpu.dimension_semantics<arbitrary>], iteration_bounds = array<i64: 1>, scalar_prefetch = 0 : i64, scratch_operands = 2 : i64, tpu.core_type = #tpu.core_type<tc>, window_params = [{transform_indices = @transform_0, window_bounds = array<i64: 8, 8, 128>}, {pipeline_mode = #tpu.pipeline_mode<synchronous>, transform_indices = @transform_1, window_bounds = array<i64: 32, 128>}, {pipeline_mode = #tpu.pipeline_mode<synchronous>, transform_indices = @transform_2, window_bounds = array<i64: 8, 32>}, {pipeline_mode = #tpu.pipeline_mode<synchronous>, transform_indices = @transform_3, window_bounds = array<i64: 8, 32>}, {transform_indices = @transform_4, window_bounds = array<i64: 8, 8, 32>}, {pipeline_mode = #tpu.pipeline_mode<synchronous>, transform_indices = @transform_5, window_bounds = array<i64: 8, 32>}, {pipeline_mode = #tpu.pipeline_mode<synchronous>, transform_indices = @transform_6, window_bounds = array<i64: 8, 32>}]} {
    %c0_i32 = arith.constant 0 : i32
    %0 = arith.cmpi eq, %arg0, %c0_i32 : i32
    %1 = arith.extui %0 : i1 to i32
    %c0_i32_0 = arith.constant 0 : i32
    %2 = arith.cmpi ne, %1, %c0_i32_0 : i32
    scf.if %2 {
      %c0_60 = arith.constant 0 : index
      %c0_61 = arith.constant 0 : index
      %203 = vector.load %arg3[%c0_60, %c0_61] : memref<8x32xf32, #tpu.memory_space<vmem>>, vector<8x32xf32>
      %c0_62 = arith.constant 0 : index
      %c0_63 = arith.constant 0 : index
      %204 = vector.load %arg8[%c0_62, %c0_63] : memref<8x32xf32, #tpu.memory_space<vmem>>, vector<8x32xf32>
      tpu.vector_store %arg8[%c0_62, %c0_63], %203 {strides = array<i32>} : memref<8x32xf32, #tpu.memory_space<vmem>>, vector<8x32xf32>,
      %c0_64 = arith.constant 0 : index
      %c0_65 = arith.constant 0 : index
      %205 = vector.load %arg4[%c0_64, %c0_65] : memref<8x32xf32, #tpu.memory_space<vmem>>, vector<8x32xf32>
      %c0_66 = arith.constant 0 : index
      %c0_67 = arith.constant 0 : index
      %206 = vector.load %arg9[%c0_66, %c0_67] : memref<8x32xf32, #tpu.memory_space<vmem>>, vector<8x32xf32>
      tpu.vector_store %arg9[%c0_66, %c0_67], %205 {strides = array<i32>} : memref<8x32xf32, #tpu.memory_space<vmem>>, vector<8x32xf32>,
    } else {
    }
    %c0 = arith.constant 0 : index
    %c0_1 = arith.constant 0 : index
    %3 = vector.load %arg2[%c0, %c0_1] : memref<32x128xf32, #tpu.memory_space<vmem>>, vector<32x128xf32>
    %c0_2 = arith.constant 0 : index
    %c0_3 = arith.constant 0 : index
    %4 = vector.load %arg8[%c0_2, %c0_3] : memref<8x32xf32, #tpu.memory_space<vmem>>, vector<8x32xf32>
    %c0_4 = arith.constant 0 : index
    %c0_5 = arith.constant 0 : index
    %5 = vector.load %arg9[%c0_4, %c0_5] : memref<8x32xf32, #tpu.memory_space<vmem>>, vector<8x32xf32>
    %c0_i32_6 = arith.constant 0 : i32
    %6 = arith.index_cast %c0_i32_6 : i32 to index
    %c0_7 = arith.constant 0 : index
    %c0_8 = arith.constant 0 : index
    %7 = vector.load %arg1[%6, %c0_7, %c0_8] : memref<8x8x128xf32, #tpu.memory_space<vmem>>, vector<1x8x128xf32>
    %8 = vector.shape_cast %7 : vector<1x8x128xf32> to vector<8x128xf32>
    %cst = arith.constant dense<0.000000e+00> : vector<8x128xf32>
    %9 = tpu.matmul %4, %3, %cst {dimension_numbers = #tpu.dot_dimension_numbers<[1], [0], [0], [1], [0, 0, 1, 1], [], []>} : vector<8x32xf32>, vector<32x128xf32>, vector<8x128xf32> -> vector<8x128xf32>
    %10 = arith.addf %8, %9 : vector<8x128xf32>
    %11 = arith.negf %10 : vector<8x128xf32>
    %12 = math.exp %11 : vector<8x128xf32>
    %cst_9 = arith.constant 1.000000e+00 : f32
    %13 = vector.broadcast %cst_9 : f32 to vector<8x128xf32>
    %14 = arith.addf %13, %12 : vector<8x128xf32>
    %15 = arith.divf %13, %14 : vector<8x128xf32>
    %16 = math.tanh %10 : vector<8x128xf32>
    %17 = vector.extract_strided_slice %15 {offsets = [0, 0], sizes = [8, 32], strides = [1, 1]} : vector<8x128xf32> to vector<8x32xf32>
    %18 = vector.extract_strided_slice %15 {offsets = [0, 32], sizes = [8, 32], strides = [1, 1]} : vector<8x128xf32> to vector<8x32xf32>
    %19 = vector.extract_strided_slice %16 {offsets = [0, 64], sizes = [8, 32], strides = [1, 1]} : vector<8x128xf32> to vector<8x32xf32>
    %20 = vector.extract_strided_slice %15 {offsets = [0, 96], sizes = [8, 32], strides = [1, 1]} : vector<8x128xf32> to vector<8x32xf32>
    %21 = arith.mulf %18, %5 : vector<8x32xf32>
    %22 = arith.mulf %17, %19 : vector<8x32xf32>
    %23 = arith.addf %21, %22 : vector<8x32xf32>
    %24 = math.tanh %23 : vector<8x32xf32>
    %25 = arith.mulf %20, %24 : vector<8x32xf32>
    %26 = arith.index_cast %c0_i32_6 : i32 to index
    %c0_10 = arith.constant 0 : index
    %c0_11 = arith.constant 0 : index
    %27 = vector.load %arg5[%26, %c0_10, %c0_11] : memref<8x8x32xf32, #tpu.memory_space<vmem>>, vector<1x8x32xf32>
    %28 = vector.shape_cast %27 : vector<1x8x32xf32> to vector<8x32xf32>
    %29 = vector.shape_cast %25 : vector<8x32xf32> to vector<1x8x32xf32>
    tpu.vector_store %arg5[%26, %c0_10, %c0_11], %29 {strides = array<i32>} : memref<8x8x32xf32, #tpu.memory_space<vmem>>, vector<1x8x32xf32>,
    %c1_i32 = arith.constant 1 : i32
    %30 = arith.index_cast %c1_i32 : i32 to index
    %c0_12 = arith.constant 0 : index
    %c0_13 = arith.constant 0 : index
    %31 = vector.load %arg1[%30, %c0_12, %c0_13] : memref<8x8x128xf32, #tpu.memory_space<vmem>>, vector<1x8x128xf32>
    %32 = vector.shape_cast %31 : vector<1x8x128xf32> to vector<8x128xf32>
    %cst_14 = arith.constant dense<0.000000e+00> : vector<8x128xf32>
    %33 = tpu.matmul %25, %3, %cst_14 {dimension_numbers = #tpu.dot_dimension_numbers<[1], [0], [0], [1], [0, 0, 1, 1], [], []>} : vector<8x32xf32>, vector<32x128xf32>, vector<8x128xf32> -> vector<8x128xf32>
    %34 = arith.addf %32, %33 : vector<8x128xf32>
    %35 = arith.negf %34 : vector<8x128xf32>
    %36 = math.exp %35 : vector<8x128xf32>
    %cst_15 = arith.constant 1.000000e+00 : f32
    %37 = vector.broadcast %cst_15 : f32 to vector<8x128xf32>
    %38 = arith.addf %37, %36 : vector<8x128xf32>
    %39 = arith.divf %37, %38 : vector<8x128xf32>
    %40 = math.tanh %34 : vector<8x128xf32>
    %41 = vector.extract_strided_slice %39 {offsets = [0, 0], sizes = [8, 32], strides = [1, 1]} : vector<8x128xf32> to vector<8x32xf32>
    %42 = vector.extract_strided_slice %39 {offsets = [0, 32], sizes = [8, 32], strides = [1, 1]} : vector<8x128xf32> to vector<8x32xf32>
    %43 = vector.extract_strided_slice %40 {offsets = [0, 64], sizes = [8, 32], strides = [1, 1]} : vector<8x128xf32> to vector<8x32xf32>
    %44 = vector.extract_strided_slice %39 {offsets = [0, 96], sizes = [8, 32], strides = [1, 1]} : vector<8x128xf32> to vector<8x32xf32>
    %45 = arith.mulf %42, %23 : vector<8x32xf32>
    %46 = arith.mulf %41, %43 : vector<8x32xf32>
    %47 = arith.addf %45, %46 : vector<8x32xf32>
    %48 = math.tanh %47 : vector<8x32xf32>
    %49 = arith.mulf %44, %48 : vector<8x32xf32>
    %50 = arith.index_cast %c1_i32 : i32 to index
    %c0_16 = arith.constant 0 : index
    %c0_17 = arith.constant 0 : index
    %51 = vector.load %arg5[%50, %c0_16, %c0_17] : memref<8x8x32xf32, #tpu.memory_space<vmem>>, vector<1x8x32xf32>
    %52 = vector.shape_cast %51 : vector<1x8x32xf32> to vector<8x32xf32>
    %53 = vector.shape_cast %49 : vector<8x32xf32> to vector<1x8x32xf32>
    tpu.vector_store %arg5[%50, %c0_16, %c0_17], %53 {strides = array<i32>} : memref<8x8x32xf32, #tpu.memory_space<vmem>>, vector<1x8x32xf32>,
    %c2_i32 = arith.constant 2 : i32
    %54 = arith.index_cast %c2_i32 : i32 to index
    %c0_18 = arith.constant 0 : index
    %c0_19 = arith.constant 0 : index
    %55 = vector.load %arg1[%54, %c0_18, %c0_19] : memref<8x8x128xf32, #tpu.memory_space<vmem>>, vector<1x8x128xf32>
    %56 = vector.shape_cast %55 : vector<1x8x128xf32> to vector<8x128xf32>
    %cst_20 = arith.constant dense<0.000000e+00> : vector<8x128xf32>
    %57 = tpu.matmul %49, %3, %cst_20 {dimension_numbers = #tpu.dot_dimension_numbers<[1], [0], [0], [1], [0, 0, 1, 1], [], []>} : vector<8x32xf32>, vector<32x128xf32>, vector<8x128xf32> -> vector<8x128xf32>
    %58 = arith.addf %56, %57 : vector<8x128xf32>
    %59 = arith.negf %58 : vector<8x128xf32>
    %60 = math.exp %59 : vector<8x128xf32>
    %cst_21 = arith.constant 1.000000e+00 : f32
    %61 = vector.broadcast %cst_21 : f32 to vector<8x128xf32>
    %62 = arith.addf %61, %60 : vector<8x128xf32>
    %63 = arith.divf %61, %62 : vector<8x128xf32>
    %64 = math.tanh %58 : vector<8x128xf32>
    %65 = vector.extract_strided_slice %63 {offsets = [0, 0], sizes = [8, 32], strides = [1, 1]} : vector<8x128xf32> to vector<8x32xf32>
    %66 = vector.extract_strided_slice %63 {offsets = [0, 32], sizes = [8, 32], strides = [1, 1]} : vector<8x128xf32> to vector<8x32xf32>
    %67 = vector.extract_strided_slice %64 {offsets = [0, 64], sizes = [8, 32], strides = [1, 1]} : vector<8x128xf32> to vector<8x32xf32>
    %68 = vector.extract_strided_slice %63 {offsets = [0, 96], sizes = [8, 32], strides = [1, 1]} : vector<8x128xf32> to vector<8x32xf32>
    %69 = arith.mulf %66, %47 : vector<8x32xf32>
    %70 = arith.mulf %65, %67 : vector<8x32xf32>
    %71 = arith.addf %69, %70 : vector<8x32xf32>
    %72 = math.tanh %71 : vector<8x32xf32>
    %73 = arith.mulf %68, %72 : vector<8x32xf32>
    %74 = arith.index_cast %c2_i32 : i32 to index
    %c0_22 = arith.constant 0 : index
    %c0_23 = arith.constant 0 : index
    %75 = vector.load %arg5[%74, %c0_22, %c0_23] : memref<8x8x32xf32, #tpu.memory_space<vmem>>, vector<1x8x32xf32>
    %76 = vector.shape_cast %75 : vector<1x8x32xf32> to vector<8x32xf32>
    %77 = vector.shape_cast %73 : vector<8x32xf32> to vector<1x8x32xf32>
    tpu.vector_store %arg5[%74, %c0_22, %c0_23], %77 {strides = array<i32>} : memref<8x8x32xf32, #tpu.memory_space<vmem>>, vector<1x8x32xf32>,
    %c3_i32 = arith.constant 3 : i32
    %78 = arith.index_cast %c3_i32 : i32 to index
    %c0_24 = arith.constant 0 : index
    %c0_25 = arith.constant 0 : index
    %79 = vector.load %arg1[%78, %c0_24, %c0_25] : memref<8x8x128xf32, #tpu.memory_space<vmem>>, vector<1x8x128xf32>
    %80 = vector.shape_cast %79 : vector<1x8x128xf32> to vector<8x128xf32>
    %cst_26 = arith.constant dense<0.000000e+00> : vector<8x128xf32>
    %81 = tpu.matmul %73, %3, %cst_26 {dimension_numbers = #tpu.dot_dimension_numbers<[1], [0], [0], [1], [0, 0, 1, 1], [], []>} : vector<8x32xf32>, vector<32x128xf32>, vector<8x128xf32> -> vector<8x128xf32>
    %82 = arith.addf %80, %81 : vector<8x128xf32>
    %83 = arith.negf %82 : vector<8x128xf32>
    %84 = math.exp %83 : vector<8x128xf32>
    %cst_27 = arith.constant 1.000000e+00 : f32
    %85 = vector.broadcast %cst_27 : f32 to vector<8x128xf32>
    %86 = arith.addf %85, %84 : vector<8x128xf32>
    %87 = arith.divf %85, %86 : vector<8x128xf32>
    %88 = math.tanh %82 : vector<8x128xf32>
    %89 = vector.extract_strided_slice %87 {offsets = [0, 0], sizes = [8, 32], strides = [1, 1]} : vector<8x128xf32> to vector<8x32xf32>
    %90 = vector.extract_strided_slice %87 {offsets = [0, 32], sizes = [8, 32], strides = [1, 1]} : vector<8x128xf32> to vector<8x32xf32>
    %91 = vector.extract_strided_slice %88 {offsets = [0, 64], sizes = [8, 32], strides = [1, 1]} : vector<8x128xf32> to vector<8x32xf32>
    %92 = vector.extract_strided_slice %87 {offsets = [0, 96], sizes = [8, 32], strides = [1, 1]} : vector<8x128xf32> to vector<8x32xf32>
    %93 = arith.mulf %90, %71 : vector<8x32xf32>
    %94 = arith.mulf %89, %91 : vector<8x32xf32>
    %95 = arith.addf %93, %94 : vector<8x32xf32>
    %96 = math.tanh %95 : vector<8x32xf32>
    %97 = arith.mulf %92, %96 : vector<8x32xf32>
    %98 = arith.index_cast %c3_i32 : i32 to index
    %c0_28 = arith.constant 0 : index
    %c0_29 = arith.constant 0 : index
    %99 = vector.load %arg5[%98, %c0_28, %c0_29] : memref<8x8x32xf32, #tpu.memory_space<vmem>>, vector<1x8x32xf32>
    %100 = vector.shape_cast %99 : vector<1x8x32xf32> to vector<8x32xf32>
    %101 = vector.shape_cast %97 : vector<8x32xf32> to vector<1x8x32xf32>
    tpu.vector_store %arg5[%98, %c0_28, %c0_29], %101 {strides = array<i32>} : memref<8x8x32xf32, #tpu.memory_space<vmem>>, vector<1x8x32xf32>,
    %c4_i32 = arith.constant 4 : i32
    %102 = arith.index_cast %c4_i32 : i32 to index
    %c0_30 = arith.constant 0 : index
    %c0_31 = arith.constant 0 : index
    %103 = vector.load %arg1[%102, %c0_30, %c0_31] : memref<8x8x128xf32, #tpu.memory_space<vmem>>, vector<1x8x128xf32>
    %104 = vector.shape_cast %103 : vector<1x8x128xf32> to vector<8x128xf32>
    %cst_32 = arith.constant dense<0.000000e+00> : vector<8x128xf32>
    %105 = tpu.matmul %97, %3, %cst_32 {dimension_numbers = #tpu.dot_dimension_numbers<[1], [0], [0], [1], [0, 0, 1, 1], [], []>} : vector<8x32xf32>, vector<32x128xf32>, vector<8x128xf32> -> vector<8x128xf32>
    %106 = arith.addf %104, %105 : vector<8x128xf32>
    %107 = arith.negf %106 : vector<8x128xf32>
    %108 = math.exp %107 : vector<8x128xf32>
    %cst_33 = arith.constant 1.000000e+00 : f32
    %109 = vector.broadcast %cst_33 : f32 to vector<8x128xf32>
    %110 = arith.addf %109, %108 : vector<8x128xf32>
    %111 = arith.divf %109, %110 : vector<8x128xf32>
    %112 = math.tanh %106 : vector<8x128xf32>
    %113 = vector.extract_strided_slice %111 {offsets = [0, 0], sizes = [8, 32], strides = [1, 1]} : vector<8x128xf32> to vector<8x32xf32>
    %114 = vector.extract_strided_slice %111 {offsets = [0, 32], sizes = [8, 32], strides = [1, 1]} : vector<8x128xf32> to vector<8x32xf32>
    %115 = vector.extract_strided_slice %112 {offsets = [0, 64], sizes = [8, 32], strides = [1, 1]} : vector<8x128xf32> to vector<8x32xf32>
    %116 = vector.extract_strided_slice %111 {offsets = [0, 96], sizes = [8, 32], strides = [1, 1]} : vector<8x128xf32> to vector<8x32xf32>
    %117 = arith.mulf %114, %95 : vector<8x32xf32>
    %118 = arith.mulf %113, %115 : vector<8x32xf32>
    %119 = arith.addf %117, %118 : vector<8x32xf32>
    %120 = math.tanh %119 : vector<8x32xf32>
    %121 = arith.mulf %116, %120 : vector<8x32xf32>
    %122 = arith.index_cast %c4_i32 : i32 to index
    %c0_34 = arith.constant 0 : index
    %c0_35 = arith.constant 0 : index
    %123 = vector.load %arg5[%122, %c0_34, %c0_35] : memref<8x8x32xf32, #tpu.memory_space<vmem>>, vector<1x8x32xf32>
    %124 = vector.shape_cast %123 : vector<1x8x32xf32> to vector<8x32xf32>
    %125 = vector.shape_cast %121 : vector<8x32xf32> to vector<1x8x32xf32>
    tpu.vector_store %arg5[%122, %c0_34, %c0_35], %125 {strides = array<i32>} : memref<8x8x32xf32, #tpu.memory_space<vmem>>, vector<1x8x32xf32>,
    %c5_i32 = arith.constant 5 : i32
    %126 = arith.index_cast %c5_i32 : i32 to index
    %c0_36 = arith.constant 0 : index
    %c0_37 = arith.constant 0 : index
    %127 = vector.load %arg1[%126, %c0_36, %c0_37] : memref<8x8x128xf32, #tpu.memory_space<vmem>>, vector<1x8x128xf32>
    %128 = vector.shape_cast %127 : vector<1x8x128xf32> to vector<8x128xf32>
    %cst_38 = arith.constant dense<0.000000e+00> : vector<8x128xf32>
    %129 = tpu.matmul %121, %3, %cst_38 {dimension_numbers = #tpu.dot_dimension_numbers<[1], [0], [0], [1], [0, 0, 1, 1], [], []>} : vector<8x32xf32>, vector<32x128xf32>, vector<8x128xf32> -> vector<8x128xf32>
    %130 = arith.addf %128, %129 : vector<8x128xf32>
    %131 = arith.negf %130 : vector<8x128xf32>
    %132 = math.exp %131 : vector<8x128xf32>
    %cst_39 = arith.constant 1.000000e+00 : f32
    %133 = vector.broadcast %cst_39 : f32 to vector<8x128xf32>
    %134 = arith.addf %133, %132 : vector<8x128xf32>
    %135 = arith.divf %133, %134 : vector<8x128xf32>
    %136 = math.tanh %130 : vector<8x128xf32>
    %137 = vector.extract_strided_slice %135 {offsets = [0, 0], sizes = [8, 32], strides = [1, 1]} : vector<8x128xf32> to vector<8x32xf32>
    %138 = vector.extract_strided_slice %135 {offsets = [0, 32], sizes = [8, 32], strides = [1, 1]} : vector<8x128xf32> to vector<8x32xf32>
    %139 = vector.extract_strided_slice %136 {offsets = [0, 64], sizes = [8, 32], strides = [1, 1]} : vector<8x128xf32> to vector<8x32xf32>
    %140 = vector.extract_strided_slice %135 {offsets = [0, 96], sizes = [8, 32], strides = [1, 1]} : vector<8x128xf32> to vector<8x32xf32>
    %141 = arith.mulf %138, %119 : vector<8x32xf32>
    %142 = arith.mulf %137, %139 : vector<8x32xf32>
    %143 = arith.addf %141, %142 : vector<8x32xf32>
    %144 = math.tanh %143 : vector<8x32xf32>
    %145 = arith.mulf %140, %144 : vector<8x32xf32>
    %146 = arith.index_cast %c5_i32 : i32 to index
    %c0_40 = arith.constant 0 : index
    %c0_41 = arith.constant 0 : index
    %147 = vector.load %arg5[%146, %c0_40, %c0_41] : memref<8x8x32xf32, #tpu.memory_space<vmem>>, vector<1x8x32xf32>
    %148 = vector.shape_cast %147 : vector<1x8x32xf32> to vector<8x32xf32>
    %149 = vector.shape_cast %145 : vector<8x32xf32> to vector<1x8x32xf32>
    tpu.vector_store %arg5[%146, %c0_40, %c0_41], %149 {strides = array<i32>} : memref<8x8x32xf32, #tpu.memory_space<vmem>>, vector<1x8x32xf32>,
    %c6_i32 = arith.constant 6 : i32
    %150 = arith.index_cast %c6_i32 : i32 to index
    %c0_42 = arith.constant 0 : index
    %c0_43 = arith.constant 0 : index
    %151 = vector.load %arg1[%150, %c0_42, %c0_43] : memref<8x8x128xf32, #tpu.memory_space<vmem>>, vector<1x8x128xf32>
    %152 = vector.shape_cast %151 : vector<1x8x128xf32> to vector<8x128xf32>
    %cst_44 = arith.constant dense<0.000000e+00> : vector<8x128xf32>
    %153 = tpu.matmul %145, %3, %cst_44 {dimension_numbers = #tpu.dot_dimension_numbers<[1], [0], [0], [1], [0, 0, 1, 1], [], []>} : vector<8x32xf32>, vector<32x128xf32>, vector<8x128xf32> -> vector<8x128xf32>
    %154 = arith.addf %152, %153 : vector<8x128xf32>
    %155 = arith.negf %154 : vector<8x128xf32>
    %156 = math.exp %155 : vector<8x128xf32>
    %cst_45 = arith.constant 1.000000e+00 : f32
    %157 = vector.broadcast %cst_45 : f32 to vector<8x128xf32>
    %158 = arith.addf %157, %156 : vector<8x128xf32>
    %159 = arith.divf %157, %158 : vector<8x128xf32>
    %160 = math.tanh %154 : vector<8x128xf32>
    %161 = vector.extract_strided_slice %159 {offsets = [0, 0], sizes = [8, 32], strides = [1, 1]} : vector<8x128xf32> to vector<8x32xf32>
    %162 = vector.extract_strided_slice %159 {offsets = [0, 32], sizes = [8, 32], strides = [1, 1]} : vector<8x128xf32> to vector<8x32xf32>
    %163 = vector.extract_strided_slice %160 {offsets = [0, 64], sizes = [8, 32], strides = [1, 1]} : vector<8x128xf32> to vector<8x32xf32>
    %164 = vector.extract_strided_slice %159 {offsets = [0, 96], sizes = [8, 32], strides = [1, 1]} : vector<8x128xf32> to vector<8x32xf32>
    %165 = arith.mulf %162, %143 : vector<8x32xf32>
    %166 = arith.mulf %161, %163 : vector<8x32xf32>
    %167 = arith.addf %165, %166 : vector<8x32xf32>
    %168 = math.tanh %167 : vector<8x32xf32>
    %169 = arith.mulf %164, %168 : vector<8x32xf32>
    %170 = arith.index_cast %c6_i32 : i32 to index
    %c0_46 = arith.constant 0 : index
    %c0_47 = arith.constant 0 : index
    %171 = vector.load %arg5[%170, %c0_46, %c0_47] : memref<8x8x32xf32, #tpu.memory_space<vmem>>, vector<1x8x32xf32>
    %172 = vector.shape_cast %171 : vector<1x8x32xf32> to vector<8x32xf32>
    %173 = vector.shape_cast %169 : vector<8x32xf32> to vector<1x8x32xf32>
    tpu.vector_store %arg5[%170, %c0_46, %c0_47], %173 {strides = array<i32>} : memref<8x8x32xf32, #tpu.memory_space<vmem>>, vector<1x8x32xf32>,
    %c7_i32 = arith.constant 7 : i32
    %174 = arith.index_cast %c7_i32 : i32 to index
    %c0_48 = arith.constant 0 : index
    %c0_49 = arith.constant 0 : index
    %175 = vector.load %arg1[%174, %c0_48, %c0_49] : memref<8x8x128xf32, #tpu.memory_space<vmem>>, vector<1x8x128xf32>
    %176 = vector.shape_cast %175 : vector<1x8x128xf32> to vector<8x128xf32>
    %cst_50 = arith.constant dense<0.000000e+00> : vector<8x128xf32>
    %177 = tpu.matmul %169, %3, %cst_50 {dimension_numbers = #tpu.dot_dimension_numbers<[1], [0], [0], [1], [0, 0, 1, 1], [], []>} : vector<8x32xf32>, vector<32x128xf32>, vector<8x128xf32> -> vector<8x128xf32>
    %178 = arith.addf %176, %177 : vector<8x128xf32>
    %179 = arith.negf %178 : vector<8x128xf32>
    %180 = math.exp %179 : vector<8x128xf32>
    %cst_51 = arith.constant 1.000000e+00 : f32
    %181 = vector.broadcast %cst_51 : f32 to vector<8x128xf32>
    %182 = arith.addf %181, %180 : vector<8x128xf32>
    %183 = arith.divf %181, %182 : vector<8x128xf32>
    %184 = math.tanh %178 : vector<8x128xf32>
    %185 = vector.extract_strided_slice %183 {offsets = [0, 0], sizes = [8, 32], strides = [1, 1]} : vector<8x128xf32> to vector<8x32xf32>
    %186 = vector.extract_strided_slice %183 {offsets = [0, 32], sizes = [8, 32], strides = [1, 1]} : vector<8x128xf32> to vector<8x32xf32>
    %187 = vector.extract_strided_slice %184 {offsets = [0, 64], sizes = [8, 32], strides = [1, 1]} : vector<8x128xf32> to vector<8x32xf32>
    %188 = vector.extract_strided_slice %183 {offsets = [0, 96], sizes = [8, 32], strides = [1, 1]} : vector<8x128xf32> to vector<8x32xf32>
    %189 = arith.mulf %186, %167 : vector<8x32xf32>
    %190 = arith.mulf %185, %187 : vector<8x32xf32>
    %191 = arith.addf %189, %190 : vector<8x32xf32>
    %192 = math.tanh %191 : vector<8x32xf32>
    %193 = arith.mulf %188, %192 : vector<8x32xf32>
    %194 = arith.index_cast %c7_i32 : i32 to index
    %c0_52 = arith.constant 0 : index
    %c0_53 = arith.constant 0 : index
    %195 = vector.load %arg5[%194, %c0_52, %c0_53] : memref<8x8x32xf32, #tpu.memory_space<vmem>>, vector<1x8x32xf32>
    %196 = vector.shape_cast %195 : vector<1x8x32xf32> to vector<8x32xf32>
    %197 = vector.shape_cast %193 : vector<8x32xf32> to vector<1x8x32xf32>
    tpu.vector_store %arg5[%194, %c0_52, %c0_53], %197 {strides = array<i32>} : memref<8x8x32xf32, #tpu.memory_space<vmem>>, vector<1x8x32xf32>,
    %c8_i32 = arith.constant 8 : i32
    %c0_54 = arith.constant 0 : index
    %c0_55 = arith.constant 0 : index
    %198 = vector.load %arg8[%c0_54, %c0_55] : memref<8x32xf32, #tpu.memory_space<vmem>>, vector<8x32xf32>
    tpu.vector_store %arg8[%c0_54, %c0_55], %193 {strides = array<i32>} : memref<8x32xf32, #tpu.memory_space<vmem>>, vector<8x32xf32>,
    %c0_56 = arith.constant 0 : index
    %c0_57 = arith.constant 0 : index
    %199 = vector.load %arg9[%c0_56, %c0_57] : memref<8x32xf32, #tpu.memory_space<vmem>>, vector<8x32xf32>
    tpu.vector_store %arg9[%c0_56, %c0_57], %191 {strides = array<i32>} : memref<8x32xf32, #tpu.memory_space<vmem>>, vector<8x32xf32>,
    %c0_i32_58 = arith.constant 0 : i32
    %200 = arith.cmpi eq, %arg0, %c0_i32_58 : i32
    %201 = arith.extui %200 : i1 to i32
    %c0_i32_59 = arith.constant 0 : i32
    %202 = arith.cmpi ne, %201, %c0_i32_59 : i32
    scf.if %202 {
      %c0_60 = arith.constant 0 : index
      %c0_61 = arith.constant 0 : index
      %203 = vector.load %arg6[%c0_60, %c0_61] : memref<8x32xf32, #tpu.memory_space<vmem>>, vector<8x32xf32>
      tpu.vector_store %arg6[%c0_60, %c0_61], %193 {strides = array<i32>} : memref<8x32xf32, #tpu.memory_space<vmem>>, vector<8x32xf32>,
      %c0_62 = arith.constant 0 : index
      %c0_63 = arith.constant 0 : index
      %204 = vector.load %arg7[%c0_62, %c0_63] : memref<8x32xf32, #tpu.memory_space<vmem>>, vector<8x32xf32>
      tpu.vector_store %arg7[%c0_62, %c0_63], %191 {strides = array<i32>} : memref<8x32xf32, #tpu.memory_space<vmem>>, vector<8x32xf32>,
    } else {
    }
    return
  }
  func.func @transform_0(%arg0: i32) -> (i32, i32, i32) {
    %c0_i32 = arith.constant 0 : i32
    %c0_i32_0 = arith.constant 0 : i32
    %c0_i32_1 = arith.constant 0 : i32
    return %arg0, %c0_i32, %c0_i32_0 : i32, i32, i32
  }
  func.func @transform_1(%arg0: i32) -> (i32, i32) {
    %c0_i32 = arith.constant 0 : i32
    %c0_i32_0 = arith.constant 0 : i32
    %c0_i32_1 = arith.constant 0 : i32
    return %c0_i32, %c0_i32_0 : i32, i32
  }
  func.func @transform_2(%arg0: i32) -> (i32, i32) {
    %c0_i32 = arith.constant 0 : i32
    %c0_i32_0 = arith.constant 0 : i32
    %c0_i32_1 = arith.constant 0 : i32
    return %c0_i32, %c0_i32_0 : i32, i32
  }
  func.func @transform_3(%arg0: i32) -> (i32, i32) {
    %c0_i32 = arith.constant 0 : i32
    %c0_i32_0 = arith.constant 0 : i32
    %c0_i32_1 = arith.constant 0 : i32
    return %c0_i32, %c0_i32_0 : i32, i32
  }
  func.func @transform_4(%arg0: i32) -> (i32, i32, i32) {
    %c0_i32 = arith.constant 0 : i32
    %c0_i32_0 = arith.constant 0 : i32
    %c0_i32_1 = arith.constant 0 : i32
    return %arg0, %c0_i32, %c0_i32_0 : i32, i32, i32
  }
  func.func @transform_5(%arg0: i32) -> (i32, i32) {
    %c0_i32 = arith.constant 0 : i32
    %c0_i32_0 = arith.constant 0 : i32
    %c0_i32_1 = arith.constant 0 : i32
    return %c0_i32, %c0_i32_0 : i32, i32
  }
  func.func @transform_6(%arg0: i32) -> (i32, i32) {
    %c0_i32 = arith.constant 0 : i32
    %c0_i32_0 = arith.constant 0 : i32
    %c0_i32_1 = arith.constant 0 : i32
    return %c0_i32, %c0_i32_0 : i32, i32
  }
}

</mosaic_0001>

<llo_original>
// kernel: decoder_forward.1
$region0: #{decoder_forward.1}
  #allocation0 [shape = 'u32[]', space=smem, size = 0x4, offset = 0x4, fixed_abs, tag = 'smem constant byte address 0x4 - core index']
  #allocation1 [shape = 'u32[144,128]{1,0:T(1,128)}', space=vmem, size = 0x12000, scoped, tag = 'internal scratch']
  #allocation2 [shape = 'f32[8,32]{1,0:T(8,128)}', space=vmem, size = 0x1000, scoped, tag = 'scratch operand']
  #allocation3 [shape = 'f32[8,32]{1,0:T(8,128)}', space=vmem, size = 0x1000, scoped, tag = 'scratch operand']
  %s0 = inlined_call_operand.vmem [shape: f32[8,8,128], index: 0, kind: input, shape index: {}]
  %s1 = inlined_call_operand.vmem [shape: f32[32,128], index: 1, kind: input, shape index: {}]
  %s2 = inlined_call_operand.vmem [shape: f32[8,32], index: 2, kind: input, shape index: {}]
  %s3 = inlined_call_operand.vmem [shape: f32[8,32], index: 3, kind: input, shape index: {}]
  %s4 = inlined_call_operand.vmem [shape: f32[8,8,32], index: 4, kind: output, shape index: {0}]
  %s5 = inlined_call_operand.hbm [shape: f32[8,32], index: 5, kind: output, shape index: {1}]
  %s6 = inlined_call_operand.hbm [shape: f32[8,32], index: 6, kind: output, shape index: {2}]
  %7 = xla_tuple %s4, %s5, %s6
  %s8 = sld [smem:[#allocation0]]
  $region50: #{decoder_forward.1} parent=0
    _
  %s10 = ssub.s32 1, %s8
  %s11 = scalar_select 0, %s10, %s8
  $region1: #{decoder_forward.1} parent=0
    #allocation4 [shape = 'u8[4096]{0}', space=vmem, size = 0x1000, scoped, tag = 'output window, operand 1, single buffered']
    #allocation5 [shape = 's32[1]{0}', space=sflag, size = 0x4, scoped, tag = 'scoped memory for decoder_forward.1']
    #allocation6 [shape = 'u8[4096]{0}', space=vmem, size = 0x1000, scoped, tag = 'output window, operand 2, single buffered']
    #allocation7 [shape = 's32[1]{0}', space=sflag, size = 0x4, scoped, tag = 'scoped memory for decoder_forward.1']
    %12 = vsyncpa [#allocation5], 0
    %13 = vsyncpa [#allocation7], 0
    // Predicated region
    $region2: #{decoder_forward.1} parent=1 // pred_check
      _
    $region3: #{decoder_forward.1} parent=1 // pred_check_branch
      %15 = sbr.rel (0) target = $region5
    $region4: #{decoder_forward.1} parent=1 // pred_region
      _
    $region5: #{decoder_forward.1} parent=1 // pred_fallthru
      _
    // Predicated region
    $region6: #{decoder_forward.1} parent=1 // pred_check
      _
    $region7: #{decoder_forward.1} parent=1 // pred_check_branch
      %17 = sbr.rel (0) target = $region9
    $region8: #{decoder_forward.1} parent=1 // pred_region
      _
    $region9: #{decoder_forward.1} parent=1 // pred_fallthru
      _
    // Predicated region
    $region10: #{decoder_forward.1} parent=1 // pred_check
      _
    $region11: #{decoder_forward.1} parent=1 // pred_check_branch
      %19 = sbr.rel (0) target = $region13
    $region12: #{decoder_forward.1} parent=1 // pred_region
      _
    $region13: #{decoder_forward.1} parent=1 // pred_fallthru
      _
    // Predicated region
    $region14: #{decoder_forward.1} parent=1 // pred_check
      _
    $region15: #{decoder_forward.1} parent=1 // pred_check_branch
      %21 = sbr.rel (0) target = $region17
    $region16: #{decoder_forward.1} parent=1 // pred_region
      _
    $region17: #{decoder_forward.1} parent=1 // pred_fallthru
      _
    %p22 = scmp.eq.s32.totalorder 0, 0
    // Predicated region
    $region18: #{decoder_forward.1} parent=1 // pred_check
      %p23 = pneg %p22
    $region19: #{decoder_forward.1} parent=1 // pred_check_branch
      %25 = sbr.rel (%p23) target = $region21
    $region20: #{decoder_forward.1} parent=1 // pred_region
      %v26 = vld [vmem:[%s2] sm:$0xff]
      %vm27 = vcmask 261120
      %28 = vst.msk [vmem:[#allocation2] sm:$0xff] %vm27, %v26
      %v29 = vld [vmem:[%s3] sm:$0xff]
      %30 = vst.msk [vmem:[#allocation3] sm:$0xff] %vm27, %v29
    $region21: #{decoder_forward.1} parent=1 // pred_fallthru
      _
    %v31 = vld [vmem:[%s1] sm:$0xff]
    %v32 = vld [vmem:[%s1 + $0x8] sm:$0xff]
    %v33 = vld [vmem:[%s1 + $0x10] sm:$0xff]
    %v34 = vld [vmem:[%s1 + $0x18] sm:$0xff]
    %v35 = vld [vmem:[#allocation2] sm:$0xff]
    %v36 = vld [vmem:[#allocation3] sm:$0xff]
    %v37 = vld [vmem:[%s0] sm:$0xff]
    %vm38 = vcmask 261120
    %v40 = vsel %vm38, %v35, 0
    %42 = vmatprep.subr.mxu0 0.0
    %43 = vmatpush1.msra.mxu0 %v31
    %44 = vmatprep.subr.mxu0 0.0
    %45 = vmatpush1.msra.mxu0 %v32
    %46 = vmatprep.subr.mxu0 0.0
    %47 = vmatpush1.msra.mxu0 %v33
    %48 = vmatprep.subr.mxu0 0.0
    %49 = vmatpush1.msra.mxu0 %v34
    %50 = vmatprep.subr.mxu0 0.0
    %51 = vmatpush1.msra.mxu0 0.0
    %52 = vmatprep.subr.mxu0 0.0
    %53 = vmatpush1.msra.mxu0 0.0
    %54 = vmatprep.subr.mxu0 0.0
    %55 = vmatpush1.msra.mxu0 0.0
    %56 = vmatprep.subr.mxu0 0.0
    %57 = vmatpush1.msra.mxu0 0.0
    %58 = vmatprep.subr.mxu0 0.0
    %59 = vmatpush1.msra.mxu0 0.0
    %60 = vmatprep.subr.mxu0 0.0
    %61 = vmatpush1.msra.mxu0 0.0
    %62 = vmatprep.subr.mxu0 0.0
    %63 = vmatpush1.msra.mxu0 0.0
    %64 = vmatprep.subr.mxu0 0.0
    %65 = vmatpush1.msra.mxu0 0.0
    %66 = vmatprep.subr.mxu0 0.0
    %67 = vmatpush1.msra.mxu0 0.0
    %68 = vmatprep.subr.mxu0 0.0
    %69 = vmatpush1.msra.mxu0 0.0
    %70 = vmatprep.subr.mxu0 0.0
    %71 = vmatpush1.msra.mxu0 0.0
    %72 = vmatprep.subr.mxu0 0.0
    %73 = vmatpush1.msra.mxu0 0.0
    %74 = vmatprep.subr.mxu0 0.0
    %75 = vmatpush1.msra.mxu0 0.0
    %76 = vmatprep.subr.mxu0 0.0
    %77 = vmatpush1.msra.mxu0 0.0
    %78 = vmatprep.subr.mxu0 0.0
    %79 = vmatpush1.msra.mxu0 0.0
    %80 = vmatprep.subr.mxu0 0.0
    %81 = vmatpush1.msra.mxu0 0.0
    %82 = vmatprep.subr.mxu0 0.0
    %83 = vmatpush1.msra.mxu0 0.0
    %84 = vmatprep.subr.mxu0 0.0
    %85 = vmatpush1.msra.mxu0 0.0
    %86 = vmatprep.subr.mxu0 0.0
    %87 = vmatpush1.msra.mxu0 0.0
    %88 = vmatprep.subr.mxu0 0.0
    %89 = vmatpush1.msra.mxu0 0.0
    %90 = vmatprep.subr.mxu0 0.0
    %91 = vmatpush1.msra.mxu0 0.0
    %92 = vmatprep.subr.mxu0 0.0
    %93 = vmatpush1.msra.mxu0 0.0
    %94 = vmatprep.subr.mxu0 0.0
    %95 = vmatpush1.msra.mxu0 0.0
    %96 = vmatprep.subr.mxu0 0.0
    %97 = vmatpush1.msra.mxu0 0.0
    %98 = vmatprep.subr.mxu0 0.0
    %99 = vmatpush1.msra.mxu0 0.0
    %100 = vmatprep.subr.mxu0 0.0
    %101 = vmatpush1.msra.mxu0 0.0
    %102 = vmatprep.subr.mxu0 0.0
    %103 = vmatpush1.msra.mxu0 0.0
    %104 = vmatprep.subr.mxu0 0.0
    %105 = vmatpush1.msra.mxu0 0.0
    %106 = vmatprep.mubr.f32.mxu0 0.0
    %107 = vmatmul.mubr.f32.gmra.mrb[0].mxu0 %v40
    %v108 = vpop.f32.mrb[0].mxu0
    %v109 = vadd.f32 0.0, %v108
    %v110 = vpop.f32.mrb[0].mxu0
    %111 = vdwg.mxu0
    %v112 = vadd.f32 %v37, %v109
    %v113 = vxor.u32 %v112, 2147483648
    %v114 = vmul.f32 %v113, 1.442695
    %v115 = vpow.pop %v114
    %v116 = vadd.f32 %v115, 1.0
    %v117 = vrcp.pop %v116
    %v118 = vmul.f32 1.0, %v117
    %v119 = vtanh.pop %v112
    %121 = vrot.lane.b32.xlu0 %v36, 32
    %v122 = vpop.permute.xlu0 %121
    %v124 = vmul.f32 %v118, %v122
    %126 = vrot.lane.b32.xlu0 %v119, 64
    %v127 = vpop.permute.xlu0 %126
    %v129 = vmul.f32 %v118, %v127
    %131 = vrot.lane.b32.xlu0 %v129, 32
    %v132 = vpop.permute.xlu0 %131
    %v134 = vadd.f32 %v124, %v132
    %v135 = vtanh.pop %v134
    %137 = vrot.lane.b32.xlu0 %v135, 64
    %v138 = vpop.permute.xlu0 %137
    %v140 = vmul.f32 %v118, %v138
    %142 = vrot.lane.b32.xlu0 %v140, 32
    %v143 = vpop.permute.xlu0 %142
    %145 = vst.msk [vmem:[%s4] sm:$0xff] %vm38, %v143
    %s146 = scalar_lea.vmem %s0, 8
    %v147 = vld [vmem:[%s146] sm:$0xff]
    %v148 = vsel %vm38, %v143, 0
    %150 = vmatprep.subr.mxu0 0.0
    %151 = vmatpush1.msra.mxu0 %v31
    %152 = vmatprep.subr.mxu0 0.0
    %153 = vmatpush1.msra.mxu0 %v32
    %154 = vmatprep.subr.mxu0 0.0
    %155 = vmatpush1.msra.mxu0 %v33
    %156 = vmatprep.subr.mxu0 0.0
    %157 = vmatpush1.msra.mxu0 %v34
    %158 = vmatprep.subr.mxu0 0.0
    %159 = vmatpush1.msra.mxu0 0.0
    %160 = vmatprep.subr.mxu0 0.0
    %161 = vmatpush1.msra.mxu0 0.0
    %162 = vmatprep.subr.mxu0 0.0
    %163 = vmatpush1.msra.mxu0 0.0
    %164 = vmatprep.subr.mxu0 0.0
    %165 = vmatpush1.msra.mxu0 0.0
    %166 = vmatprep.subr.mxu0 0.0
    %167 = vmatpush1.msra.mxu0 0.0
    %168 = vmatprep.subr.mxu0 0.0
    %169 = vmatpush1.msra.mxu0 0.0
    %170 = vmatprep.subr.mxu0 0.0
    %171 = vmatpush1.msra.mxu0 0.0
    %172 = vmatprep.subr.mxu0 0.0
    %173 = vmatpush1.msra.mxu0 0.0
    %174 = vmatprep.subr.mxu0 0.0
    %175 = vmatpush1.msra.mxu0 0.0
    %176 = vmatprep.subr.mxu0 0.0
    %177 = vmatpush1.msra.mxu0 0.0
    %178 = vmatprep.subr.mxu0 0.0
    %179 = vmatpush1.msra.mxu0 0.0
    %180 = vmatprep.subr.mxu0 0.0
    %181 = vmatpush1.msra.mxu0 0.0
    %182 = vmatprep.subr.mxu0 0.0
    %183 = vmatpush1.msra.mxu0 0.0
    %184 = vmatprep.subr.mxu0 0.0
    %185 = vmatpush1.msra.mxu0 0.0
    %186 = vmatprep.subr.mxu0 0.0
    %187 = vmatpush1.msra.mxu0 0.0
    %188 = vmatprep.subr.mxu0 0.0
    %189 = vmatpush1.msra.mxu0 0.0
    %190 = vmatprep.subr.mxu0 0.0
    %191 = vmatpush1.msra.mxu0 0.0
    %192 = vmatprep.subr.mxu0 0.0
    %193 = vmatpush1.msra.mxu0 0.0
    %194 = vmatprep.subr.mxu0 0.0
    %195 = vmatpush1.msra.mxu0 0.0
    %196 = vmatprep.subr.mxu0 0.0
    %197 = vmatpush1.msra.mxu0 0.0
    %198 = vmatprep.subr.mxu0 0.0
    %199 = vmatpush1.msra.mxu0 0.0
    %200 = vmatprep.subr.mxu0 0.0
    %201 = vmatpush1.msra.mxu0 0.0
    %202 = vmatprep.subr.mxu0 0.0
    %203 = vmatpush1.msra.mxu0 0.0
    %204 = vmatprep.subr.mxu0 0.0
    %205 = vmatpush1.msra.mxu0 0.0
    %206 = vmatprep.subr.mxu0 0.0
    %207 = vmatpush1.msra.mxu0 0.0
    %208 = vmatprep.subr.mxu0 0.0
    %209 = vmatpush1.msra.mxu0 0.0
    %210 = vmatprep.subr.mxu0 0.0
    %211 = vmatpush1.msra.mxu0 0.0
    %212 = vmatprep.subr.mxu0 0.0
    %213 = vmatpush1.msra.mxu0 0.0
    %214 = vmatprep.mubr.f32.mxu0 0.0
    %215 = vmatmul.mubr.f32.gmra.mrb[0].mxu0 %v148
    %v216 = vpop.f32.mrb[0].mxu0
    %v217 = vadd.f32 0.0, %v216
    %v218 = vpop.f32.mrb[0].mxu0
    %219 = vdwg.mxu0
    %v220 = vadd.f32 %v147, %v217
    %v221 = vxor.u32 %v220, 2147483648
    %v222 = vmul.f32 %v221, 1.442695
    %v223 = vpow.pop %v222
    %v224 = vadd.f32 %v223, 1.0
    %v225 = vrcp.pop %v224
    %v226 = vmul.f32 1.0, %v225
    %v227 = vtanh.pop %v220
    %v228 = vmul.f32 %v226, %v134
    %230 = vrot.lane.b32.xlu0 %v227, 64
    %v231 = vpop.permute.xlu0 %230
    %v233 = vmul.f32 %v226, %v231
    %235 = vrot.lane.b32.xlu0 %v233, 32
    %v236 = vpop.permute.xlu0 %235
    %v238 = vadd.f32 %v228, %v236
    %v239 = vtanh.pop %v238
    %241 = vrot.lane.b32.xlu0 %v239, 64
    %v242 = vpop.permute.xlu0 %241
    %v244 = vmul.f32 %v226, %v242
    %246 = vrot.lane.b32.xlu0 %v244, 32
    %v247 = vpop.permute.xlu0 %246
    %s249 = scalar_lea.vmem %s4, 8
    %250 = vst.msk [vmem:[%s249] sm:$0xff] %vm38, %v247
    %s251 = scalar_lea.vmem %s0, 16
    %v252 = vld [vmem:[%s251] sm:$0xff]
    %v253 = vsel %vm38, %v247, 0
    %255 = vmatprep.subr.mxu0 0.0
    %256 = vmatpush1.msra.mxu0 %v31
    %257 = vmatprep.subr.mxu0 0.0
    %258 = vmatpush1.msra.mxu0 %v32
    %259 = vmatprep.subr.mxu0 0.0
    %260 = vmatpush1.msra.mxu0 %v33
    %261 = vmatprep.subr.mxu0 0.0
    %262 = vmatpush1.msra.mxu0 %v34
    %263 = vmatprep.subr.mxu0 0.0
    %264 = vmatpush1.msra.mxu0 0.0
    %265 = vmatprep.subr.mxu0 0.0
    %266 = vmatpush1.msra.mxu0 0.0
    %267 = vmatprep.subr.mxu0 0.0
    %268 = vmatpush1.msra.mxu0 0.0
    %269 = vmatprep.subr.mxu0 0.0
    %270 = vmatpush1.msra.mxu0 0.0
    %271 = vmatprep.subr.mxu0 0.0
    %272 = vmatpush1.msra.mxu0 0.0
    %273 = vmatprep.subr.mxu0 0.0
    %274 = vmatpush1.msra.mxu0 0.0
    %275 = vmatprep.subr.mxu0 0.0
    %276 = vmatpush1.msra.mxu0 0.0
    %277 = vmatprep.subr.mxu0 0.0
    %278 = vmatpush1.msra.mxu0 0.0
    %279 = vmatprep.subr.mxu0 0.0
    %280 = vmatpush1.msra.mxu0 0.0
    %281 = vmatprep.subr.mxu0 0.0
    %282 = vmatpush1.msra.mxu0 0.0
    %283 = vmatprep.subr.mxu0 0.0
    %284 = vmatpush1.msra.mxu0 0.0
    %285 = vmatprep.subr.mxu0 0.0
    %286 = vmatpush1.msra.mxu0 0.0
    %287 = vmatprep.subr.mxu0 0.0
    %288 = vmatpush1.msra.mxu0 0.0
    %289 = vmatprep.subr.mxu0 0.0
    %290 = vmatpush1.msra.mxu0 0.0
    %291 = vmatprep.subr.mxu0 0.0
    %292 = vmatpush1.msra.mxu0 0.0
    %293 = vmatprep.subr.mxu0 0.0
    %294 = vmatpush1.msra.mxu0 0.0
    %295 = vmatprep.subr.mxu0 0.0
    %296 = vmatpush1.msra.mxu0 0.0
    %297 = vmatprep.subr.mxu0 0.0
    %298 = vmatpush1.msra.mxu0 0.0
    %299 = vmatprep.subr.mxu0 0.0
    %300 = vmatpush1.msra.mxu0 0.0
    %301 = vmatprep.subr.mxu0 0.0
    %302 = vmatpush1.msra.mxu0 0.0
    %303 = vmatprep.subr.mxu0 0.0
    %304 = vmatpush1.msra.mxu0 0.0
    %305 = vmatprep.subr.mxu0 0.0
    %306 = vmatpush1.msra.mxu0 0.0
    %307 = vmatprep.subr.mxu0 0.0
    %308 = vmatpush1.msra.mxu0 0.0
    %309 = vmatprep.subr.mxu0 0.0
    %310 = vmatpush1.msra.mxu0 0.0
    %311 = vmatprep.subr.mxu0 0.0
    %312 = vmatpush1.msra.mxu0 0.0
    %313 = vmatprep.subr.mxu0 0.0
    %314 = vmatpush1.msra.mxu0 0.0
    %315 = vmatprep.subr.mxu0 0.0
    %316 = vmatpush1.msra.mxu0 0.0
    %317 = vmatprep.subr.mxu0 0.0
    %318 = vmatpush1.msra.mxu0 0.0
    %319 = vmatprep.mubr.f32.mxu0 0.0
    %320 = vmatmul.mubr.f32.gmra.mrb[0].mxu0 %v253
    %v321 = vpop.f32.mrb[0].mxu0
    %v322 = vadd.f32 0.0, %v321
    %v323 = vpop.f32.mrb[0].mxu0
    %324 = vdwg.mxu0
    %v325 = vadd.f32 %v252, %v322
    %v326 = vxor.u32 %v325, 2147483648
    %v327 = vmul.f32 %v326, 1.442695
    %v328 = vpow.pop %v327
    %v329 = vadd.f32 %v328, 1.0
    %v330 = vrcp.pop %v329
    %v331 = vmul.f32 1.0, %v330
    %v332 = vtanh.pop %v325
    %v333 = vmul.f32 %v331, %v238
    %335 = vrot.lane.b32.xlu0 %v332, 64
    %v336 = vpop.permute.xlu0 %335
    %v338 = vmul.f32 %v331, %v336
    %340 = vrot.lane.b32.xlu0 %v338, 32
    %v341 = vpop.permute.xlu0 %340
    %v343 = vadd.f32 %v333, %v341
    %v344 = vtanh.pop %v343
    %346 = vrot.lane.b32.xlu0 %v344, 64
    %v347 = vpop.permute.xlu0 %346
    %v349 = vmul.f32 %v331, %v347
    %351 = vrot.lane.b32.xlu0 %v349, 32
    %v352 = vpop.permute.xlu0 %351
    %s354 = scalar_lea.vmem %s4, 16
    %355 = vst.msk [vmem:[%s354] sm:$0xff] %vm38, %v352
    %s356 = scalar_lea.vmem %s0, 24
    %v357 = vld [vmem:[%s356] sm:$0xff]
    %v358 = vsel %vm38, %v352, 0
    %360 = vmatprep.subr.mxu0 0.0
    %361 = vmatpush1.msra.mxu0 %v31
    %362 = vmatprep.subr.mxu0 0.0
    %363 = vmatpush1.msra.mxu0 %v32
    %364 = vmatprep.subr.mxu0 0.0
    %365 = vmatpush1.msra.mxu0 %v33
    %366 = vmatprep.subr.mxu0 0.0
    %367 = vmatpush1.msra.mxu0 %v34
    %368 = vmatprep.subr.mxu0 0.0
    %369 = vmatpush1.msra.mxu0 0.0
    %370 = vmatprep.subr.mxu0 0.0
    %371 = vmatpush1.msra.mxu0 0.0
    %372 = vmatprep.subr.mxu0 0.0
    %373 = vmatpush1.msra.mxu0 0.0
    %374 = vmatprep.subr.mxu0 0.0
    %375 = vmatpush1.msra.mxu0 0.0
    %376 = vmatprep.subr.mxu0 0.0
    %377 = vmatpush1.msra.mxu0 0.0
    %378 = vmatprep.subr.mxu0 0.0
    %379 = vmatpush1.msra.mxu0 0.0
    %380 = vmatprep.subr.mxu0 0.0
    %381 = vmatpush1.msra.mxu0 0.0
    %382 = vmatprep.subr.mxu0 0.0
    %383 = vmatpush1.msra.mxu0 0.0
    %384 = vmatprep.subr.mxu0 0.0
    %385 = vmatpush1.msra.mxu0 0.0
    %386 = vmatprep.subr.mxu0 0.0
    %387 = vmatpush1.msra.mxu0 0.0
    %388 = vmatprep.subr.mxu0 0.0
    %389 = vmatpush1.msra.mxu0 0.0
    %390 = vmatprep.subr.mxu0 0.0
    %391 = vmatpush1.msra.mxu0 0.0
    %392 = vmatprep.subr.mxu0 0.0
    %393 = vmatpush1.msra.mxu0 0.0
    %394 = vmatprep.subr.mxu0 0.0
    %395 = vmatpush1.msra.mxu0 0.0
    %396 = vmatprep.subr.mxu0 0.0
    %397 = vmatpush1.msra.mxu0 0.0
    %398 = vmatprep.subr.mxu0 0.0
    %399 = vmatpush1.msra.mxu0 0.0
    %400 = vmatprep.subr.mxu0 0.0
    %401 = vmatpush1.msra.mxu0 0.0
    %402 = vmatprep.subr.mxu0 0.0
    %403 = vmatpush1.msra.mxu0 0.0
    %404 = vmatprep.subr.mxu0 0.0
    %405 = vmatpush1.msra.mxu0 0.0
    %406 = vmatprep.subr.mxu0 0.0
    %407 = vmatpush1.msra.mxu0 0.0
    %408 = vmatprep.subr.mxu0 0.0
    %409 = vmatpush1.msra.mxu0 0.0
    %410 = vmatprep.subr.mxu0 0.0
    %411 = vmatpush1.msra.mxu0 0.0
    %412 = vmatprep.subr.mxu0 0.0
    %413 = vmatpush1.msra.mxu0 0.0
    %414 = vmatprep.subr.mxu0 0.0
    %415 = vmatpush1.msra.mxu0 0.0
    %416 = vmatprep.subr.mxu0 0.0
    %417 = vmatpush1.msra.mxu0 0.0
    %418 = vmatprep.subr.mxu0 0.0
    %419 = vmatpush1.msra.mxu0 0.0
    %420 = vmatprep.subr.mxu0 0.0
    %421 = vmatpush1.msra.mxu0 0.0
    %422 = vmatprep.subr.mxu0 0.0
    %423 = vmatpush1.msra.mxu0 0.0
    %424 = vmatprep.mubr.f32.mxu0 0.0
    %425 = vmatmul.mubr.f32.gmra.mrb[0].mxu0 %v358
    %v426 = vpop.f32.mrb[0].mxu0
    %v427 = vadd.f32 0.0, %v426
    %v428 = vpop.f32.mrb[0].mxu0
    %429 = vdwg.mxu0
    %v430 = vadd.f32 %v357, %v427
    %v431 = vxor.u32 %v430, 2147483648
    %v432 = vmul.f32 %v431, 1.442695
    %v433 = vpow.pop %v432
    %v434 = vadd.f32 %v433, 1.0
    %v435 = vrcp.pop %v434
    %v436 = vmul.f32 1.0, %v435
    %v437 = vtanh.pop %v430
    %v438 = vmul.f32 %v436, %v343
    %440 = vrot.lane.b32.xlu0 %v437, 64
    %v441 = vpop.permute.xlu0 %440
    %v443 = vmul.f32 %v436, %v441
    %445 = vrot.lane.b32.xlu0 %v443, 32
    %v446 = vpop.permute.xlu0 %445
    %v448 = vadd.f32 %v438, %v446
    %v449 = vtanh.pop %v448
    %451 = vrot.lane.b32.xlu0 %v449, 64
    %v452 = vpop.permute.xlu0 %451
    %v454 = vmul.f32 %v436, %v452
    %456 = vrot.lane.b32.xlu0 %v454, 32
    %v457 = vpop.permute.xlu0 %456
    %s459 = scalar_lea.vmem %s4, 24
    %460 = vst.msk [vmem:[%s459] sm:$0xff] %vm38, %v457
    %s461 = scalar_lea.vmem %s0, 32
    %v462 = vld [vmem:[%s461] sm:$0xff]
    %v463 = vsel %vm38, %v457, 0
    %465 = vmatprep.subr.mxu0 0.0
    %466 = vmatpush1.msra.mxu0 %v31
    %467 = vmatprep.subr.mxu0 0.0
    %468 = vmatpush1.msra.mxu0 %v32
    %469 = vmatprep.subr.mxu0 0.0
    %470 = vmatpush1.msra.mxu0 %v33
    %471 = vmatprep.subr.mxu0 0.0
    %472 = vmatpush1.msra.mxu0 %v34
    %473 = vmatprep.subr.mxu0 0.0
    %474 = vmatpush1.msra.mxu0 0.0
    %475 = vmatprep.subr.mxu0 0.0
    %476 = vmatpush1.msra.mxu0 0.0
    %477 = vmatprep.subr.mxu0 0.0
    %478 = vmatpush1.msra.mxu0 0.0
    %479 = vmatprep.subr.mxu0 0.0
    %480 = vmatpush1.msra.mxu0 0.0
    %481 = vmatprep.subr.mxu0 0.0
    %482 = vmatpush1.msra.mxu0 0.0
    %483 = vmatprep.subr.mxu0 0.0
    %484 = vmatpush1.msra.mxu0 0.0
    %485 = vmatprep.subr.mxu0 0.0
    %486 = vmatpush1.msra.mxu0 0.0
    %487 = vmatprep.subr.mxu0 0.0
    %488 = vmatpush1.msra.mxu0 0.0
    %489 = vmatprep.subr.mxu0 0.0
    %490 = vmatpush1.msra.mxu0 0.0
    %491 = vmatprep.subr.mxu0 0.0
    %492 = vmatpush1.msra.mxu0 0.0
    %493 = vmatprep.subr.mxu0 0.0
    %494 = vmatpush1.msra.mxu0 0.0
    %495 = vmatprep.subr.mxu0 0.0
    %496 = vmatpush1.msra.mxu0 0.0
    %497 = vmatprep.subr.mxu0 0.0
    %498 = vmatpush1.msra.mxu0 0.0
    %499 = vmatprep.subr.mxu0 0.0
    %500 = vmatpush1.msra.mxu0 0.0
    %501 = vmatprep.subr.mxu0 0.0
    %502 = vmatpush1.msra.mxu0 0.0
    %503 = vmatprep.subr.mxu0 0.0
    %504 = vmatpush1.msra.mxu0 0.0
    %505 = vmatprep.subr.mxu0 0.0
    %506 = vmatpush1.msra.mxu0 0.0
    %507 = vmatprep.subr.mxu0 0.0
    %508 = vmatpush1.msra.mxu0 0.0
    %509 = vmatprep.subr.mxu0 0.0
    %510 = vmatpush1.msra.mxu0 0.0
    %511 = vmatprep.subr.mxu0 0.0
    %512 = vmatpush1.msra.mxu0 0.0
    %513 = vmatprep.subr.mxu0 0.0
    %514 = vmatpush1.msra.mxu0 0.0
    %515 = vmatprep.subr.mxu0 0.0
    %516 = vmatpush1.msra.mxu0 0.0
    %517 = vmatprep.subr.mxu0 0.0
    %518 = vmatpush1.msra.mxu0 0.0
    %519 = vmatprep.subr.mxu0 0.0
    %520 = vmatpush1.msra.mxu0 0.0
    %521 = vmatprep.subr.mxu0 0.0
    %522 = vmatpush1.msra.mxu0 0.0
    %523 = vmatprep.subr.mxu0 0.0
    %524 = vmatpush1.msra.mxu0 0.0
    %525 = vmatprep.subr.mxu0 0.0
    %526 = vmatpush1.msra.mxu0 0.0
    %527 = vmatprep.subr.mxu0 0.0
    %528 = vmatpush1.msra.mxu0 0.0
    %529 = vmatprep.mubr.f32.mxu0 0.0
    %530 = vmatmul.mubr.f32.gmra.mrb[0].mxu0 %v463
    %v531 = vpop.f32.mrb[0].mxu0
    %v532 = vadd.f32 0.0, %v531
    %v533 = vpop.f32.mrb[0].mxu0
    %534 = vdwg.mxu0
    %v535 = vadd.f32 %v462, %v532
    %v536 = vxor.u32 %v535, 2147483648
    %v537 = vmul.f32 %v536, 1.442695
    %v538 = vpow.pop %v537
    %v539 = vadd.f32 %v538, 1.0
    %v540 = vrcp.pop %v539
    %v541 = vmul.f32 1.0, %v540
    %v542 = vtanh.pop %v535
    %v543 = vmul.f32 %v541, %v448
    %545 = vrot.lane.b32.xlu0 %v542, 64
    %v546 = vpop.permute.xlu0 %545
    %v548 = vmul.f32 %v541, %v546
    %550 = vrot.lane.b32.xlu0 %v548, 32
    %v551 = vpop.permute.xlu0 %550
    %v553 = vadd.f32 %v543, %v551
    %v554 = vtanh.pop %v553
    %556 = vrot.lane.b32.xlu0 %v554, 64
    %v557 = vpop.permute.xlu0 %556
    %v559 = vmul.f32 %v541, %v557
    %561 = vrot.lane.b32.xlu0 %v559, 32
    %v562 = vpop.permute.xlu0 %561
    %s564 = scalar_lea.vmem %s4, 32
    %565 = vst.msk [vmem:[%s564] sm:$0xff] %vm38, %v562
    %s566 = scalar_lea.vmem %s0, 40
    %v567 = vld [vmem:[%s566] sm:$0xff]
    %v568 = vsel %vm38, %v562, 0
    %570 = vmatprep.subr.mxu0 0.0
    %571 = vmatpush1.msra.mxu0 %v31
    %572 = vmatprep.subr.mxu0 0.0
    %573 = vmatpush1.msra.mxu0 %v32
    %574 = vmatprep.subr.mxu0 0.0
    %575 = vmatpush1.msra.mxu0 %v33
    %576 = vmatprep.subr.mxu0 0.0
    %577 = vmatpush1.msra.mxu0 %v34
    %578 = vmatprep.subr.mxu0 0.0
    %579 = vmatpush1.msra.mxu0 0.0
    %580 = vmatprep.subr.mxu0 0.0
    %581 = vmatpush1.msra.mxu0 0.0
    %582 = vmatprep.subr.mxu0 0.0
    %583 = vmatpush1.msra.mxu0 0.0
    %584 = vmatprep.subr.mxu0 0.0
    %585 = vmatpush1.msra.mxu0 0.0
    %586 = vmatprep.subr.mxu0 0.0
    %587 = vmatpush1.msra.mxu0 0.0
    %588 = vmatprep.subr.mxu0 0.0
    %589 = vmatpush1.msra.mxu0 0.0
    %590 = vmatprep.subr.mxu0 0.0
    %591 = vmatpush1.msra.mxu0 0.0
    %592 = vmatprep.subr.mxu0 0.0
    %593 = vmatpush1.msra.mxu0 0.0
    %594 = vmatprep.subr.mxu0 0.0
    %595 = vmatpush1.msra.mxu0 0.0
    %596 = vmatprep.subr.mxu0 0.0
    %597 = vmatpush1.msra.mxu0 0.0
    %598 = vmatprep.subr.mxu0 0.0
    %599 = vmatpush1.msra.mxu0 0.0
    %600 = vmatprep.subr.mxu0 0.0
    %601 = vmatpush1.msra.mxu0 0.0
    %602 = vmatprep.subr.mxu0 0.0
    %603 = vmatpush1.msra.mxu0 0.0
    %604 = vmatprep.subr.mxu0 0.0
    %605 = vmatpush1.msra.mxu0 0.0
    %606 = vmatprep.subr.mxu0 0.0
    %607 = vmatpush1.msra.mxu0 0.0
    %608 = vmatprep.subr.mxu0 0.0
    %609 = vmatpush1.msra.mxu0 0.0
    %610 = vmatprep.subr.mxu0 0.0
    %611 = vmatpush1.msra.mxu0 0.0
    %612 = vmatprep.subr.mxu0 0.0
    %613 = vmatpush1.msra.mxu0 0.0
    %614 = vmatprep.subr.mxu0 0.0
    %615 = vmatpush1.msra.mxu0 0.0
    %616 = vmatprep.subr.mxu0 0.0
    %617 = vmatpush1.msra.mxu0 0.0
    %618 = vmatprep.subr.mxu0 0.0
    %619 = vmatpush1.msra.mxu0 0.0
    %620 = vmatprep.subr.mxu0 0.0
    %621 = vmatpush1.msra.mxu0 0.0
    %622 = vmatprep.subr.mxu0 0.0
    %623 = vmatpush1.msra.mxu0 0.0
    %624 = vmatprep.subr.mxu0 0.0
    %625 = vmatpush1.msra.mxu0 0.0
    %626 = vmatprep.subr.mxu0 0.0
    %627 = vmatpush1.msra.mxu0 0.0
    %628 = vmatprep.subr.mxu0 0.0
    %629 = vmatpush1.msra.mxu0 0.0
    %630 = vmatprep.subr.mxu0 0.0
    %631 = vmatpush1.msra.mxu0 0.0
    %632 = vmatprep.subr.mxu0 0.0
    %633 = vmatpush1.msra.mxu0 0.0
    %634 = vmatprep.mubr.f32.mxu0 0.0
    %635 = vmatmul.mubr.f32.gmra.mrb[0].mxu0 %v568
    %v636 = vpop.f32.mrb[0].mxu0
    %v637 = vadd.f32 0.0, %v636
    %v638 = vpop.f32.mrb[0].mxu0
    %639 = vdwg.mxu0
    %v640 = vadd.f32 %v567, %v637
    %v641 = vxor.u32 %v640, 2147483648
    %v642 = vmul.f32 %v641, 1.442695
    %v643 = vpow.pop %v642
    %v644 = vadd.f32 %v643, 1.0
    %v645 = vrcp.pop %v644
    %v646 = vmul.f32 1.0, %v645
    %v647 = vtanh.pop %v640
    %v648 = vmul.f32 %v646, %v553
    %650 = vrot.lane.b32.xlu0 %v647, 64
    %v651 = vpop.permute.xlu0 %650
    %v653 = vmul.f32 %v646, %v651
    %655 = vrot.lane.b32.xlu0 %v653, 32
    %v656 = vpop.permute.xlu0 %655
    %v658 = vadd.f32 %v648, %v656
    %v659 = vtanh.pop %v658
    %661 = vrot.lane.b32.xlu0 %v659, 64
    %v662 = vpop.permute.xlu0 %661
    %v664 = vmul.f32 %v646, %v662
    %666 = vrot.lane.b32.xlu0 %v664, 32
    %v667 = vpop.permute.xlu0 %666
    %s669 = scalar_lea.vmem %s4, 40
    %670 = vst.msk [vmem:[%s669] sm:$0xff] %vm38, %v667
    %s671 = scalar_lea.vmem %s0, 48
    %v672 = vld [vmem:[%s671] sm:$0xff]
    %v673 = vsel %vm38, %v667, 0
    %675 = vmatprep.subr.mxu0 0.0
    %676 = vmatpush1.msra.mxu0 %v31
    %677 = vmatprep.subr.mxu0 0.0
    %678 = vmatpush1.msra.mxu0 %v32
    %679 = vmatprep.subr.mxu0 0.0
    %680 = vmatpush1.msra.mxu0 %v33
    %681 = vmatprep.subr.mxu0 0.0
    %682 = vmatpush1.msra.mxu0 %v34
    %683 = vmatprep.subr.mxu0 0.0
    %684 = vmatpush1.msra.mxu0 0.0
    %685 = vmatprep.subr.mxu0 0.0
    %686 = vmatpush1.msra.mxu0 0.0
    %687 = vmatprep.subr.mxu0 0.0
    %688 = vmatpush1.msra.mxu0 0.0
    %689 = vmatprep.subr.mxu0 0.0
    %690 = vmatpush1.msra.mxu0 0.0
    %691 = vmatprep.subr.mxu0 0.0
    %692 = vmatpush1.msra.mxu0 0.0
    %693 = vmatprep.subr.mxu0 0.0
    %694 = vmatpush1.msra.mxu0 0.0
    %695 = vmatprep.subr.mxu0 0.0
    %696 = vmatpush1.msra.mxu0 0.0
    %697 = vmatprep.subr.mxu0 0.0
    %698 = vmatpush1.msra.mxu0 0.0
    %699 = vmatprep.subr.mxu0 0.0
    %700 = vmatpush1.msra.mxu0 0.0
    %701 = vmatprep.subr.mxu0 0.0
    %702 = vmatpush1.msra.mxu0 0.0
    %703 = vmatprep.subr.mxu0 0.0
    %704 = vmatpush1.msra.mxu0 0.0
    %705 = vmatprep.subr.mxu0 0.0
    %706 = vmatpush1.msra.mxu0 0.0
    %707 = vmatprep.subr.mxu0 0.0
    %708 = vmatpush1.msra.mxu0 0.0
    %709 = vmatprep.subr.mxu0 0.0
    %710 = vmatpush1.msra.mxu0 0.0
    %711 = vmatprep.subr.mxu0 0.0
    %712 = vmatpush1.msra.mxu0 0.0
    %713 = vmatprep.subr.mxu0 0.0
    %714 = vmatpush1.msra.mxu0 0.0
    %715 = vmatprep.subr.mxu0 0.0
    %716 = vmatpush1.msra.mxu0 0.0
    %717 = vmatprep.subr.mxu0 0.0
    %718 = vmatpush1.msra.mxu0 0.0
    %719 = vmatprep.subr.mxu0 0.0
    %720 = vmatpush1.msra.mxu0 0.0
    %721 = vmatprep.subr.mxu0 0.0
    %722 = vmatpush1.msra.mxu0 0.0
    %723 = vmatprep.subr.mxu0 0.0
    %724 = vmatpush1.msra.mxu0 0.0
    %725 = vmatprep.subr.mxu0 0.0
    %726 = vmatpush1.msra.mxu0 0.0
    %727 = vmatprep.subr.mxu0 0.0
    %728 = vmatpush1.msra.mxu0 0.0
    %729 = vmatprep.subr.mxu0 0.0
    %730 = vmatpush1.msra.mxu0 0.0
    %731 = vmatprep.subr.mxu0 0.0
    %732 = vmatpush1.msra.mxu0 0.0
    %733 = vmatprep.subr.mxu0 0.0
    %734 = vmatpush1.msra.mxu0 0.0
    %735 = vmatprep.subr.mxu0 0.0
    %736 = vmatpush1.msra.mxu0 0.0
    %737 = vmatprep.subr.mxu0 0.0
    %738 = vmatpush1.msra.mxu0 0.0
    %739 = vmatprep.mubr.f32.mxu0 0.0
    %740 = vmatmul.mubr.f32.gmra.mrb[0].mxu0 %v673
    %v741 = vpop.f32.mrb[0].mxu0
    %v742 = vadd.f32 0.0, %v741
    %v743 = vpop.f32.mrb[0].mxu0
    %744 = vdwg.mxu0
    %v745 = vadd.f32 %v672, %v742
    %v746 = vxor.u32 %v745, 2147483648
    %v747 = vmul.f32 %v746, 1.442695
    %v748 = vpow.pop %v747
    %v749 = vadd.f32 %v748, 1.0
    %v750 = vrcp.pop %v749
    %v751 = vmul.f32 1.0, %v750
    %v752 = vtanh.pop %v745
    %v753 = vmul.f32 %v751, %v658
    %755 = vrot.lane.b32.xlu0 %v752, 64
    %v756 = vpop.permute.xlu0 %755
    %v758 = vmul.f32 %v751, %v756
    %760 = vrot.lane.b32.xlu0 %v758, 32
    %v761 = vpop.permute.xlu0 %760
    %v763 = vadd.f32 %v753, %v761
    %v764 = vtanh.pop %v763
    %766 = vrot.lane.b32.xlu0 %v764, 64
    %v767 = vpop.permute.xlu0 %766
    %v769 = vmul.f32 %v751, %v767
    %771 = vrot.lane.b32.xlu0 %v769, 32
    %v772 = vpop.permute.xlu0 %771
    %s774 = scalar_lea.vmem %s4, 48
    %775 = vst.msk [vmem:[%s774] sm:$0xff] %vm38, %v772
    %s776 = scalar_lea.vmem %s0, 56
    %v777 = vld [vmem:[%s776] sm:$0xff]
    %v778 = vsel %vm38, %v772, 0
    %780 = vmatprep.subr.mxu0 0.0
    %781 = vmatpush1.msra.mxu0 %v31
    %782 = vmatprep.subr.mxu0 0.0
    %783 = vmatpush1.msra.mxu0 %v32
    %784 = vmatprep.subr.mxu0 0.0
    %785 = vmatpush1.msra.mxu0 %v33
    %786 = vmatprep.subr.mxu0 0.0
    %787 = vmatpush1.msra.mxu0 %v34
    %788 = vmatprep.subr.mxu0 0.0
    %789 = vmatpush1.msra.mxu0 0.0
    %790 = vmatprep.subr.mxu0 0.0
    %791 = vmatpush1.msra.mxu0 0.0
    %792 = vmatprep.subr.mxu0 0.0
    %793 = vmatpush1.msra.mxu0 0.0
    %794 = vmatprep.subr.mxu0 0.0
    %795 = vmatpush1.msra.mxu0 0.0
    %796 = vmatprep.subr.mxu0 0.0
    %797 = vmatpush1.msra.mxu0 0.0
    %798 = vmatprep.subr.mxu0 0.0
    %799 = vmatpush1.msra.mxu0 0.0
    %800 = vmatprep.subr.mxu0 0.0
    %801 = vmatpush1.msra.mxu0 0.0
    %802 = vmatprep.subr.mxu0 0.0
    %803 = vmatpush1.msra.mxu0 0.0
    %804 = vmatprep.subr.mxu0 0.0
    %805 = vmatpush1.msra.mxu0 0.0
    %806 = vmatprep.subr.mxu0 0.0
    %807 = vmatpush1.msra.mxu0 0.0
    %808 = vmatprep.subr.mxu0 0.0
    %809 = vmatpush1.msra.mxu0 0.0
    %810 = vmatprep.subr.mxu0 0.0
    %811 = vmatpush1.msra.mxu0 0.0
    %812 = vmatprep.subr.mxu0 0.0
    %813 = vmatpush1.msra.mxu0 0.0
    %814 = vmatprep.subr.mxu0 0.0
    %815 = vmatpush1.msra.mxu0 0.0
    %816 = vmatprep.subr.mxu0 0.0
    %817 = vmatpush1.msra.mxu0 0.0
    %818 = vmatprep.subr.mxu0 0.0
    %819 = vmatpush1.msra.mxu0 0.0
    %820 = vmatprep.subr.mxu0 0.0
    %821 = vmatpush1.msra.mxu0 0.0
    %822 = vmatprep.subr.mxu0 0.0
    %823 = vmatpush1.msra.mxu0 0.0
    %824 = vmatprep.subr.mxu0 0.0
    %825 = vmatpush1.msra.mxu0 0.0
    %826 = vmatprep.subr.mxu0 0.0
    %827 = vmatpush1.msra.mxu0 0.0
    %828 = vmatprep.subr.mxu0 0.0
    %829 = vmatpush1.msra.mxu0 0.0
    %830 = vmatprep.subr.mxu0 0.0
    %831 = vmatpush1.msra.mxu0 0.0
    %832 = vmatprep.subr.mxu0 0.0
    %833 = vmatpush1.msra.mxu0 0.0
    %834 = vmatprep.subr.mxu0 0.0
    %835 = vmatpush1.msra.mxu0 0.0
    %836 = vmatprep.subr.mxu0 0.0
    %837 = vmatpush1.msra.mxu0 0.0
    %838 = vmatprep.subr.mxu0 0.0
    %839 = vmatpush1.msra.mxu0 0.0
    %840 = vmatprep.subr.mxu0 0.0
    %841 = vmatpush1.msra.mxu0 0.0
    %842 = vmatprep.subr.mxu0 0.0
    %843 = vmatpush1.msra.mxu0 0.0
    %844 = vmatprep.mubr.f32.mxu0 0.0
    %845 = vmatmul.mubr.f32.gmra.mrb[0].mxu0 %v778
    %v846 = vpop.f32.mrb[0].mxu0
    %v847 = vadd.f32 0.0, %v846
    %v848 = vpop.f32.mrb[0].mxu0
    %849 = vdwg.mxu0
    %v850 = vadd.f32 %v777, %v847
    %v851 = vxor.u32 %v850, 2147483648
    %v852 = vmul.f32 %v851, 1.442695
    %v853 = vpow.pop %v852
    %v854 = vadd.f32 %v853, 1.0
    %v855 = vrcp.pop %v854
    %v856 = vmul.f32 1.0, %v855
    %v857 = vtanh.pop %v850
    %v858 = vmul.f32 %v856, %v763
    %860 = vrot.lane.b32.xlu0 %v857, 64
    %v861 = vpop.permute.xlu0 %860
    %v863 = vmul.f32 %v856, %v861
    %865 = vrot.lane.b32.xlu0 %v863, 32
    %v866 = vpop.permute.xlu0 %865
    %v868 = vadd.f32 %v858, %v866
    %v869 = vtanh.pop %v868
    %871 = vrot.lane.b32.xlu0 %v869, 64
    %v872 = vpop.permute.xlu0 %871
    %v874 = vmul.f32 %v856, %v872
    %876 = vrot.lane.b32.xlu0 %v874, 32
    %v877 = vpop.permute.xlu0 %876
    %s879 = scalar_lea.vmem %s4, 56
    %880 = vst.msk [vmem:[%s879] sm:$0xff] %vm38, %v877
    %881 = vst.msk [vmem:[#allocation2] sm:$0xff] %vm38, %v877
    %883 = vrot.lane.b32.xlu0 %v868, 96
    %v884 = vpop.permute.xlu0 %883
    %886 = vst.msk [vmem:[#allocation3] sm:$0xff] %vm38, %v884
    // Predicated region
    $region22: #{decoder_forward.1} parent=1 // pred_check
      %p887 = pneg %p22
    $region23: #{decoder_forward.1} parent=1 // pred_check_branch
      %889 = sbr.rel (%p887) target = $region25
    $region24: #{decoder_forward.1} parent=1 // pred_region
      %890 = vst.msk [vmem:[#allocation4] sm:$0xff] %vm38, %v877
      %891 = vst.msk [vmem:[#allocation6] sm:$0xff] %vm38, %v884
    $region25: #{decoder_forward.1} parent=1 // pred_fallthru
      _
    // Predicated region
    $region26: #{decoder_forward.1} parent=1 // pred_check
      _
    $region27: #{decoder_forward.1} parent=1 // pred_check_branch
      %893 = sbr.rel (0) target = $region29
    $region28: #{decoder_forward.1} parent=1 // pred_region
      _
    $region29: #{decoder_forward.1} parent=1 // pred_fallthru
      _
    // Predicated region
    $region30: #{decoder_forward.1} parent=1 // pred_check
      _
    $region31: #{decoder_forward.1} parent=1 // pred_check_branch
      %895 = sbr.rel (0) target = $region33
    $region32: #{decoder_forward.1} parent=1 // pred_region
      %s897 = ssub.s32 128, 128
      %898 = vsyncadd [#allocation5], %s897
      %s900 = sshll.u32 [#allocation4], 4
      %s901 = int_to_ptr.vmem [resolvable:$true] %s900
      %903 = dma.vmem_to_hbm [thread:$0]  %s901, 128, %s5, [#allocation5]
    $region33: #{decoder_forward.1} parent=1 // pred_fallthru
      _
    // Predicated region
    $region34: #{decoder_forward.1} parent=1 // pred_check
      _
    $region35: #{decoder_forward.1} parent=1 // pred_check_branch
      %905 = sbr.rel (0) target = $region37
    $region36: #{decoder_forward.1} parent=1 // pred_region
      %s907 = ssub.s32 128, 128
      %908 = vsyncadd [#allocation7], %s907
      %s910 = sshll.u32 [#allocation6], 4
      %s911 = int_to_ptr.vmem [resolvable:$true] %s910
      %913 = dma.vmem_to_hbm [thread:$0]  %s911, 128, %s6, [#allocation7]
    $region37: #{decoder_forward.1} parent=1 // pred_fallthru
      _
    // Predicated region
    $region38: #{decoder_forward.1} parent=1 // pred_check
      _
    $region39: #{decoder_forward.1} parent=1 // pred_check_branch
      %915 = sbr.rel (0) target = $region41
    $region40: #{decoder_forward.1} parent=1 // pred_region
      _
    $region41: #{decoder_forward.1} parent=1 // pred_fallthru
      _
    // Predicated region
    $region42: #{decoder_forward.1} parent=1 // pred_check
      _
    $region43: #{decoder_forward.1} parent=1 // pred_check_branch
      %917 = sbr.rel (0) target = $region45
    $region44: #{decoder_forward.1} parent=1 // pred_region
      %918 = dma.done [#allocation5], 128
    $region45: #{decoder_forward.1} parent=1 // pred_fallthru
      _
    // Predicated region
    $region46: #{decoder_forward.1} parent=1 // pred_check
      _
    $region47: #{decoder_forward.1} parent=1 // pred_check_branch
      %920 = sbr.rel (0) target = $region49
    $region48: #{decoder_forward.1} parent=1 // pred_region
      %921 = dma.done [#allocation7], 128
    $region49: #{decoder_forward.1} parent=1 // pred_fallthru
      _
    %922 = vsyncpa [#allocation5], 1
    %923 = vsyncpa [#allocation7], 1

</llo_original>
